<compile_context>
chip_gen: v7x
topology: tpu7x:2x2x1
jax: 0.10.0
libtpu: 0.0.40
codegen_flags: <defaults>
</compile_context>

<pallas_src>
import functools

import jax
import jax.numpy as jnp
from jax import lax
from jax.experimental import pallas as pl
from jax.experimental.pallas import tpu as pltpu

NEG_INF = -1e30   # finite mask fill (avoids inf-inf -> NaN); safe because every causal
                  # query row has at least one unmasked key (the diagonal).
LANES = 128       # lane-dense width for the running max / sum scratch (dense vst).


def _vmem_limit(*component_bytes):
    # Explicit VMEM budget: sum of the main buffers with 2x headroom for Mosaic
    # temporaries, clamped to [32 MiB, 96 MiB].
    # v7x note: physical VMEM is 64 MiB/TensorCore — keep tile/C small enough that the
    # un-clamped estimate stays well under that.
    est = 2 * sum(component_bytes)
    return int(min(96 * 1024 * 1024, max(32 * 1024 * 1024, est)))


# --------------------------------------------------------------------------------------
# Kernel 1: fused QKV projection, computed once per (batch, seq tile).
# --------------------------------------------------------------------------------------
def qkv_projection_kernel(x_ref, wqkv_ref, q_ref, k_ref, v_ref, *,
                          num_heads, head_size, tile, mxu_dtype):
    H, hs = num_heads, head_size
    C = H * hs
    x = x_ref[0]                                                         # (tile, C) bf16
    p = jnp.dot(x, wqkv_ref[...], preferred_element_type=jnp.float32)   # (tile, 3C) f32

    def to_head_major(block):                                            # (tile, C) ->
        return block.astype(mxu_dtype).reshape(tile, H, hs).transpose(1, 0, 2)

    q_ref[0] = to_head_major(p[:, :C])        # softmax scale already folded into Wq
    k_ref[0] = to_head_major(p[:, C:2 * C])
    v_ref[0] = to_head_major(p[:, 2 * C:])


# --------------------------------------------------------------------------------------
# Kernel 2: flash attention over a lower-triangular (q-tile, kv-tile) schedule,
#           with the output projection fused on the diagonal (final) kv step.
# --------------------------------------------------------------------------------------
def flash_attention_kernel(qi_ids_ref, kv_ids_ref,
                           q_ref, k_ref, v_ref, wproj_ref, bproj_ref,
                           o_ref,
                           m_scratch, l_scratch, acc_scratch, *,
                           num_heads, head_size, tile, mxu_dtype):
    H, hs = num_heads, head_size
    C = H * hs
    step = pl.program_id(1)
    qi = qi_ids_ref[step]
    kv = kv_ids_ref[step]

    @pl.when(kv == 0)   # first kv step of every q-tile group
    def _init():
        m_scratch[...] = jnp.full_like(m_scratch, NEG_INF)
        l_scratch[...] = jnp.zeros_like(l_scratch)
        acc_scratch[...] = jnp.zeros_like(acc_scratch)

    q = q_ref[0]                                  # (H, TQ, hs)  bf16, pre-scaled
    k = k_ref[0]                                  # (H, TKV, hs) bf16
    v = v_ref[0]                                  # (H, TKV, hs) bf16
    s = jnp.einsum('hqd,hkd->hqk', q, k,
                   preferred_element_type=jnp.float32)       # (H, TQ, TKV) f32

    def online_softmax_update(scores):
        m_prev = m_scratch[...]                               # (H, TQ, LANES) replicated
        s_max = jnp.max(scores, axis=-1, keepdims=True)       # (H, TQ, 1)
        m_new = jnp.maximum(m_prev, s_max)                    # stays replicated
        alpha = jnp.exp(m_prev - m_new)                       # (H, TQ, LANES)
        p = jnp.exp(scores - m_new[..., :1])                  # (H, TQ, TKV)
        l_scratch[...] = alpha * l_scratch[...] + jnp.sum(p, axis=-1, keepdims=True)
        m_scratch[...] = m_new
        acc_scratch[...] = alpha[..., :1] * acc_scratch[...] + jnp.einsum(
            'hqk,hkd->hqd', p.astype(mxu_dtype), v,
            preferred_element_type=jnp.float32)               # (H, TQ, hs)

    # Strictly-below-diagonal tiles: the causal mask is all-true, skip it entirely.
    @pl.when(kv < qi)
    def _off_diagonal():
        online_softmax_update(s)

    # Diagonal tile: mask, update, then normalize + fused output projection.
    @pl.when(kv == qi)
    def _diagonal_and_finalize():
        causal = (lax.broadcasted_iota(jnp.int32, (tile, tile), 0) >=
                  lax.broadcasted_iota(jnp.int32, (tile, tile), 1))
        online_softmax_update(jnp.where(causal[None, :, :], s, NEG_INF))

        inv_l = pl.reciprocal(l_scratch[...], approx=True)[..., :1]   # (H, TQ, 1)
        attn = acc_scratch[...] * inv_l                               # (H, TQ, hs) f32
        attn = attn.transpose(1, 0, 2).reshape(tile, C)               # once per q-tile
        out = jnp.dot(attn.astype(mxu_dtype), wproj_ref[...],
                      preferred_element_type=jnp.float32) + bproj_ref[...]
        # TODO(synk): nn.Dropout on attention weights / output is identity (eval mode).
        o_ref[0] = out.astype(o_ref.dtype)


# --------------------------------------------------------------------------------------
# Wrapper
# --------------------------------------------------------------------------------------
def multi_head_attention(x, params, num_heads, *, tile=None, mxu_dtype=jnp.bfloat16):
    B, T, C = x.shape
    head_size = C // num_heads
    assert num_heads * head_size == C
    # Production note: prefer C a multiple of 128 and head_size >= 128 for MXU fill;
    # smaller shapes are still correct, just lane-sparse.

    if tile is None:
        tile = next((c for c in (256, 128) if T % c == 0), T)
    assert T % tile == 0, "T must be a multiple of the tile size"
    nt = T // tile
    H, hs = num_heads, head_size
    out_dtype = x.dtype
    scale = C ** -0.5   # embedding-size scaling, exactly as the PyTorch reference

    # bf16 in HBM for everything that streams through the MXU; f32 accumulation inside.
    x_bf = x.astype(mxu_dtype)
    wqkv = jnp.concatenate(
        [params["wq"] * scale, params["wk"], params["wv"]], axis=1).astype(mxu_dtype)
    wproj = params["wproj"].astype(mxu_dtype)                        # (C, C)
    bproj = params["bproj"].astype(jnp.float32)                      # (1, C), added in f32

    # ---- Kernel 1: QKV projection -> head-major bf16 (B, H, T, hs) -------------------
    proj_kernel = functools.partial(qkv_projection_kernel, num_heads=H,
                                    head_size=hs, tile=tile, mxu_dtype=mxu_dtype)
    qkv_shape = jax.ShapeDtypeStruct((B, H, T, hs), mxu_dtype)
    q, k, v = pl.pallas_call(
        proj_kernel,
        out_shape=(qkv_shape, qkv_shape, qkv_shape),
        grid_spec=pltpu.PrefetchScalarGridSpec(
            num_scalar_prefetch=0,
            grid=(B, nt),
            in_specs=[
                pl.BlockSpec((1, tile, C), lambda b, ti: (b, ti, 0)),
                pl.BlockSpec((C, 3 * C), lambda b, ti: (0, 0),
                             pipeline_mode=pl.Buffered(1)),           # single-buffered
            ],
            out_specs=[
                pl.BlockSpec((1, H, tile, hs), lambda b, ti: (b, 0, ti, 0)),
                pl.BlockSpec((1, H, tile, hs), lambda b, ti: (b, 0, ti, 0)),
                pl.BlockSpec((1, H, tile, hs), lambda b, ti: (b, 0, ti, 0)),
            ],
        ),
        compiler_params=pltpu.CompilerParams(
            dimension_semantics=("parallel", "parallel"),
            vmem_limit_bytes=_vmem_limit(
                6 * C * C * 2,            # wqkv (C,3C) bf16, single-buffered
                2 * 2 * tile * C * 2,     # x blocks, double-buffered bf16
                3 * 2 * 2 * tile * C * 2, # q/k/v out blocks, double-buffered bf16
                tile * 3 * C * 4,         # f32 projection temporary
            ),
        ),
    )(x_bf, wqkv)

    # ---- Lower-triangular (qi, kv) schedule, prefetched into SMEM --------------------
    pair_qi, pair_kv = [], []
    for qi_ in range(nt):
        for kv_ in range(qi_ + 1):        # kv ascending; diagonal last within each group
            pair_qi.append(qi_)
            pair_kv.append(kv_)
    qi_ids = jnp.asarray(pair_qi, jnp.int32)
    kv_ids = jnp.asarray(pair_kv, jnp.int32)
    num_steps = len(pair_qi)              # nt * (nt + 1) // 2

    # ---- Kernel 2: flash attention + output projection --------------------------------
    flash_kernel = functools.partial(flash_attention_kernel, num_heads=H,
                                     head_size=hs, tile=tile, mxu_dtype=mxu_dtype)
    out = pl.pallas_call(
        flash_kernel,
        out_shape=jax.ShapeDtypeStruct((B, T, C), out_dtype),
        grid_spec=pltpu.PrefetchScalarGridSpec(
            num_scalar_prefetch=2,
            grid=(B, num_steps),
            in_specs=[
                # q block index is constant across a q-tile group -> stays resident.
                pl.BlockSpec((1, H, tile, hs), lambda b, p, qi, kv: (b, 0, qi[p], 0)),
                pl.BlockSpec((1, H, tile, hs), lambda b, p, qi, kv: (b, 0, kv[p], 0)),
                pl.BlockSpec((1, H, tile, hs), lambda b, p, qi, kv: (b, 0, kv[p], 0)),
                pl.BlockSpec((C, C), lambda b, p, qi, kv: (0, 0),
                             pipeline_mode=pl.Buffered(1)),            # wproj
                pl.BlockSpec((1, C), lambda b, p, qi, kv: (0, 0),
                             pipeline_mode=pl.Buffered(1)),            # bproj
            ],
            out_specs=pl.BlockSpec((1, tile, C), lambda b, p, qi, kv: (b, qi[p], 0)),
            scratch_shapes=[
                pltpu.VMEM((H, tile, LANES), jnp.float32),   # running max (lane-dense)
                pltpu.VMEM((H, tile, LANES), jnp.float32),   # running sum (lane-dense)
                pltpu.VMEM((H, tile, hs), jnp.float32),      # output accumulator
            ],
        ),
        compiler_params=pltpu.CompilerParams(
            dimension_semantics=("parallel", "arbitrary"),
            vmem_limit_bytes=_vmem_limit(
                C * C * 2 + C * 4,                            # wproj + bproj
                3 * 2 * H * tile * hs * 2,                    # q/k/v blocks, double-buf
                2 * tile * C * jnp.dtype(out_dtype).itemsize, # out block, double-buf
                2 * H * tile * LANES * 4 + H * tile * hs * 4, # scratch
                2 * H * tile * tile * 4,                      # s / p temporaries
            ),
        ),
    )(qi_ids, kv_ids, q, k, v, wproj, bproj)
    return out


# --------------------------------------------------------------------------------------
# Reference + test
# --------------------------------------------------------------------------------------
def make_params(key, C):
    ks = jax.random.split(key, 5)
    s = 0.02
    return {
        # heads are packed along output columns (head h -> cols [h*hs, (h+1)*hs))
        "wq": s * jax.random.normal(ks[0], (C, C), jnp.float32),
        "wk": s * jax.random.normal(ks[1], (C, C), jnp.float32),
        "wv": s * jax.random.normal(ks[2], (C, C), jnp.float32),
        "wproj": s * jax.random.normal(ks[3], (C, C), jnp.float32),
        "bproj": s * jax.random.normal(ks[4], (1, C), jnp.float32),
    }


def reference_mha(x, p, num_heads):
    # Pure-JAX mirror of the PyTorch MultiHeadAttention forward (eval mode).
    B, T, C = x.shape
    hs = C // num_heads
    q = x @ p["wq"]
    k = x @ p["wk"]
    v = x @ p["wv"]
    mask = jnp.tril(jnp.ones((T, T), bool))
    outs = []
    for h in range(num_heads):
        sl = slice(h * hs, (h + 1) * hs)
        w = jnp.einsum("btd,bsd->bts", q[..., sl], k[..., sl]) * C ** -0.5
        w = jnp.where(mask, w, -jnp.inf)
        w = jax.nn.softmax(w, axis=-1)
        outs.append(jnp.einsum("bts,bsd->btd", w, v[..., sl]))
    out = jnp.concatenate(outs, -1)
    return out @ p["wproj"] + p["bproj"]


if __name__ == "__main__":
    # 2 q-tiles -> triangular schedule [(0,0),(1,0),(1,1)] exercises init/accumulate/finalize.
    B, T, C, num_heads = 2, 16, 32, 4
    key = jax.random.PRNGKey(0)
    kx, kp = jax.random.split(key)
    x = jax.random.normal(kx, (B, T, C), jnp.float32)
    params = make_params(kp, C)

    out = multi_head_attention(x, params, num_heads, tile=8)
    out = jax.block_until_ready(out)

    ref = reference_mha(x, params, num_heads)
    assert out.shape == (B, T, C)
    # bf16 MXU operands/intermediates + approx reciprocal -> slightly relaxed tolerance.
    assert jnp.allclose(out, ref, atol=5e-3, rtol=5e-2), "mismatch vs reference"
    print("KERNEL_OK")
</pallas_src>

<mosaic_0001>
module attributes {stable_mosaic.version = 11 : i64} {
  func.func @qkv_projection_kernel(%arg0: i32, %arg1: i32, %arg2: memref<1x8x32xbf16, #tpu.memory_space<vmem>>, %arg3: memref<32x96xbf16, #tpu.memory_space<vmem>>, %arg4: memref<1x4x8x8xbf16, #tpu.memory_space<vmem>>, %arg5: memref<1x4x8x8xbf16, #tpu.memory_space<vmem>>, %arg6: memref<1x4x8x8xbf16, #tpu.memory_space<vmem>>) attributes {dimension_semantics = [#tpu.dimension_semantics<parallel>, #tpu.dimension_semantics<parallel>], iteration_bounds = array<i64: 2, 2>, scalar_prefetch = 0 : i64, scratch_operands = 0 : i64, tpu.core_type = #tpu.core_type<tc>, window_params = [{transform_indices = @transform_0, window_bounds = array<i64: 1, 8, 32>}, {pipeline_mode = #tpu.pipeline_mode<synchronous>, transform_indices = @transform_1, window_bounds = array<i64: 32, 96>}, {transform_indices = @transform_2, window_bounds = array<i64: 1, 4, 8, 8>}, {transform_indices = @transform_3, window_bounds = array<i64: 1, 4, 8, 8>}, {transform_indices = @transform_4, window_bounds = array<i64: 1, 4, 8, 8>}]} {
    %c0 = arith.constant 0 : index
    %c0_0 = arith.constant 0 : index
    %c0_1 = arith.constant 0 : index
    %0 = vector.load %arg2[%c0, %c0_0, %c0_1] : memref<1x8x32xbf16, #tpu.memory_space<vmem>>, vector<1x8x32xbf16>
    %1 = vector.shape_cast %0 : vector<1x8x32xbf16> to vector<8x32xbf16>
    %c0_2 = arith.constant 0 : index
    %c0_3 = arith.constant 0 : index
    %2 = vector.load %arg3[%c0_2, %c0_3] : memref<32x96xbf16, #tpu.memory_space<vmem>>, vector<32x96xbf16>
    %cst = arith.constant dense<0.000000e+00> : vector<8x96xf32>
    %3 = tpu.matmul %1, %2, %cst {dimension_numbers = #tpu.dot_dimension_numbers<[1], [0], [0], [1], [0, 0, 1, 1], [], []>} : vector<8x32xbf16>, vector<32x96xbf16>, vector<8x96xf32> -> vector<8x96xf32>
    %4 = vector.extract_strided_slice %3 {offsets = [0, 0], sizes = [8, 32], strides = [1, 1]} : vector<8x96xf32> to vector<8x32xf32>
    %5 = arith.truncf %4 : vector<8x32xf32> to vector<8x32xbf16>
    %6 = vector.shape_cast %5 : vector<8x32xbf16> to vector<8x4x8xbf16>
    %7 = tpu.transpose %6, [1, 0, 2] : vector<8x4x8xbf16> -> vector<4x8x8xbf16>
    %c0_4 = arith.constant 0 : index
    %c0_5 = arith.constant 0 : index
    %c0_6 = arith.constant 0 : index
    %c0_7 = arith.constant 0 : index
    %8 = vector.load %arg4[%c0_4, %c0_5, %c0_6, %c0_7] : memref<1x4x8x8xbf16, #tpu.memory_space<vmem>>, vector<1x4x8x8xbf16>
    %9 = vector.shape_cast %8 : vector<1x4x8x8xbf16> to vector<4x8x8xbf16>
    %10 = vector.shape_cast %7 : vector<4x8x8xbf16> to vector<1x4x8x8xbf16>
    tpu.vector_store %arg4[%c0_4, %c0_5, %c0_6, %c0_7], %10 {strides = array<i32>} : memref<1x4x8x8xbf16, #tpu.memory_space<vmem>>, vector<1x4x8x8xbf16>,
    %11 = vector.extract_strided_slice %3 {offsets = [0, 32], sizes = [8, 32], strides = [1, 1]} : vector<8x96xf32> to vector<8x32xf32>
    %12 = arith.truncf %11 : vector<8x32xf32> to vector<8x32xbf16>
    %13 = vector.shape_cast %12 : vector<8x32xbf16> to vector<8x4x8xbf16>
    %14 = tpu.transpose %13, [1, 0, 2] : vector<8x4x8xbf16> -> vector<4x8x8xbf16>
    %c0_8 = arith.constant 0 : index
    %c0_9 = arith.constant 0 : index
    %c0_10 = arith.constant 0 : index
    %c0_11 = arith.constant 0 : index
    %15 = vector.load %arg5[%c0_8, %c0_9, %c0_10, %c0_11] : memref<1x4x8x8xbf16, #tpu.memory_space<vmem>>, vector<1x4x8x8xbf16>
    %16 = vector.shape_cast %15 : vector<1x4x8x8xbf16> to vector<4x8x8xbf16>
    %17 = vector.shape_cast %14 : vector<4x8x8xbf16> to vector<1x4x8x8xbf16>
    tpu.vector_store %arg5[%c0_8, %c0_9, %c0_10, %c0_11], %17 {strides = array<i32>} : memref<1x4x8x8xbf16, #tpu.memory_space<vmem>>, vector<1x4x8x8xbf16>,
    %18 = vector.extract_strided_slice %3 {offsets = [0, 64], sizes = [8, 32], strides = [1, 1]} : vector<8x96xf32> to vector<8x32xf32>
    %19 = arith.truncf %18 : vector<8x32xf32> to vector<8x32xbf16>
    %20 = vector.shape_cast %19 : vector<8x32xbf16> to vector<8x4x8xbf16>
    %21 = tpu.transpose %20, [1, 0, 2] : vector<8x4x8xbf16> -> vector<4x8x8xbf16>
    %c0_12 = arith.constant 0 : index
    %c0_13 = arith.constant 0 : index
    %c0_14 = arith.constant 0 : index
    %c0_15 = arith.constant 0 : index
    %22 = vector.load %arg6[%c0_12, %c0_13, %c0_14, %c0_15] : memref<1x4x8x8xbf16, #tpu.memory_space<vmem>>, vector<1x4x8x8xbf16>
    %23 = vector.shape_cast %22 : vector<1x4x8x8xbf16> to vector<4x8x8xbf16>
    %24 = vector.shape_cast %21 : vector<4x8x8xbf16> to vector<1x4x8x8xbf16>
    tpu.vector_store %arg6[%c0_12, %c0_13, %c0_14, %c0_15], %24 {strides = array<i32>} : memref<1x4x8x8xbf16, #tpu.memory_space<vmem>>, vector<1x4x8x8xbf16>,
    return
  }
  func.func @transform_0(%arg0: i32, %arg1: i32) -> (i32, i32, i32) {
    %c0_i32 = arith.constant 0 : i32
    %c0_i32_0 = arith.constant 0 : i32
    return %arg0, %arg1, %c0_i32 : i32, i32, i32
  }
  func.func @transform_1(%arg0: i32, %arg1: i32) -> (i32, i32) {
    %c0_i32 = arith.constant 0 : i32
    %c0_i32_0 = arith.constant 0 : i32
    %c0_i32_1 = arith.constant 0 : i32
    return %c0_i32, %c0_i32_0 : i32, i32
  }
  func.func @transform_2(%arg0: i32, %arg1: i32) -> (i32, i32, i32, i32) {
    %c0_i32 = arith.constant 0 : i32
    %c0_i32_0 = arith.constant 0 : i32
    %c0_i32_1 = arith.constant 0 : i32
    return %arg0, %c0_i32, %arg1, %c0_i32_0 : i32, i32, i32, i32
  }
  func.func @transform_3(%arg0: i32, %arg1: i32) -> (i32, i32, i32, i32) {
    %c0_i32 = arith.constant 0 : i32
    %c0_i32_0 = arith.constant 0 : i32
    %c0_i32_1 = arith.constant 0 : i32
    return %arg0, %c0_i32, %arg1, %c0_i32_0 : i32, i32, i32, i32
  }
  func.func @transform_4(%arg0: i32, %arg1: i32) -> (i32, i32, i32, i32) {
    %c0_i32 = arith.constant 0 : i32
    %c0_i32_0 = arith.constant 0 : i32
    %c0_i32_1 = arith.constant 0 : i32
    return %arg0, %c0_i32, %arg1, %c0_i32_0 : i32, i32, i32, i32
  }
}

</mosaic_0001>

<llo_original>
// kernel: tpu_custom_call.1
$region0: #{tpu_custom_call.1}
  #allocation0 [shape = 'u32[]', space=smem, size = 0x4, offset = 0x4, fixed_abs, tag = 'smem constant byte address 0x4 - core index']
  #allocation1 [shape = 'u32[144,128]{1,0:T(1,128)}', space=vmem, size = 0x12000, scoped, tag = 'internal scratch']
  %s0 = inlined_call_operand.hbm [shape: bf16[2,16,32], index: 0, kind: input, shape index: {}]
  %s1 = inlined_call_operand.hbm [shape: bf16[32,96], index: 1, kind: input, shape index: {}]
  %s2 = inlined_call_operand.vmem [shape: bf16[2,4,16,8], index: 2, kind: output, shape index: {0}]
  %s3 = inlined_call_operand.vmem [shape: bf16[2,4,16,8], index: 3, kind: output, shape index: {1}]
  %s4 = inlined_call_operand.vmem [shape: bf16[2,4,16,8], index: 4, kind: output, shape index: {2}]
  %5 = xla_tuple %s2, %s3, %s4
  %s6 = sld [smem:[#allocation0]]
  $region176: #{tpu_custom_call.1} parent=0
    _
  %s8 = ssub.s32 1, %s6
  %s9 = scalar_select 0, %s8, %s6
  $region1: #{tpu_custom_call.1} parent=0
    #allocation2 [shape = 'u8[4096]{0}', space=vmem, size = 0x1000, scoped, tag = 'input window, operand 0']
    #allocation3 [shape = 's32[2]{0}', space=sflag, size = 0x8, scoped, tag = 'scoped memory for tpu_custom_call.1']
    #allocation4 [shape = 'u8[8192]{0}', space=vmem, size = 0x2000, scoped, tag = 'input window, operand 1, single buffered']
    #allocation5 [shape = 's32[1]{0}', space=sflag, size = 0x4, scoped, tag = 'scoped memory for tpu_custom_call.1']
    #allocation6 [shape = 'u8[16384]{0}', space=vmem, size = 0x4000, scoped, tag = 'output window, operand 0']
    #allocation7 [shape = 'u8[16384]{0}', space=vmem, size = 0x4000, scoped, tag = 'output window, operand 1']
    #allocation8 [shape = 'u8[16384]{0}', space=vmem, size = 0x4000, scoped, tag = 'output window, operand 2']
    %10 = vsyncpa [#allocation3], 0
    %s11 = scalar_lea.sflag [#allocation3], 1
    %12 = vsyncpa %s11, 0
    %13 = vsyncpa [#allocation5], 0
    loop: start=0, step=1, limit=6
    $region2: #{tpu_custom_call.1} parent=1 // loop_pre_header
      _
    $region3: #{tpu_custom_call.1} parent=1 // loop_header
      %s15 = sphi 0, %s19
      %p16 = scmp.ge.s32.totalorder %s15, 6
      %s22 = sphi 0, %s34
      %s23 = sphi 0, %s30
      %s24 = sphi 0, %s22
      %s25 = sphi 0, %s23
      %s26 = sphi 0, %s24
      %s27 = sphi 0, %s25
      %s39 = sphi 0, %s41
      %s42 = sphi 0, %s39
      %s43 = sphi 0, %s42
      %s59 = sphi 0, %s43
      %s63 = sphi 0, %s63
      %s65 = sphi 0, %s63
      %s66 = sphi 0, %s65
      %s80 = sphi 0, %s66
      %s88 = sphi 0, %s90
      %s91 = sphi 0, %s88
      %s92 = sphi 0, %s91
      %s108 = sphi 0, %s92
      %s116 = sphi 0, %s118
      %s119 = sphi 0, %s116
      %s120 = sphi 0, %s119
      %s136 = sphi 0, %s120
      %s144 = sphi 0, %s146
      %s147 = sphi 0, %s144
      %s148 = sphi 0, %s147
      %s164 = sphi 0, %s148
    $region4: #{tpu_custom_call.1} parent=1 // loop_header_branch
      %18 = sbr.rel (%p16) target = $region8
    $region5: #{tpu_custom_call.1} parent=1 // loop_body
      %s20 = ssub.s32 %s15, 1
      %s21 = ssub.s32 %s15, 2
      %s28 = sadd.s32 1, %s23
      %p29 = scmp.ge.s32.totalorder %s28, 2
      %s30 = scalar_select %p29, 0, %s28
      %s31 = sadd.s32 1, %s22
      %s32 = scalar_select %p29, %s31, %s22
      %p33 = scmp.ge.s32.totalorder %s32, 2
      %s34 = scalar_select %p33, 0, %s32
      %s35 = ssub.s32 %s22, %s34
      %s36 = ssub.s32 %s23, %s30
      %s37 = sor.u32 %s35, %s36
      %p38 = scmp.eq.s32.totalorder %s37, 0
      %s40 = sadd.s32 %s39, 1
      %s41 = scalar_select %p38, %s39, %s40
      %p44 = pneg %p38
      %p45 = scmp.eq.s32.totalorder %s15, 3
      %p46 = por %p44, %p45
      %p47 = scmp.ne.s32.totalorder %s39, %s42
      %p48 = scmp.eq.s32.totalorder %s15, 0
      %p49 = por %p47, %p48
      %p50 = scmp.ne.s32.totalorder %s39, %s42
      %p51 = scmp.eq.s32.totalorder %s20, 3
      %p52 = por %p50, %p51
      %p53 = scmp.ne.s32.totalorder %s42, %s43
      %p54 = scmp.eq.s32.totalorder %s20, 0
      %p55 = por %p53, %p54
      %p56 = scmp.ne.s32.totalorder %s42, %s43
      %p57 = scmp.eq.s32.totalorder %s21, 3
      %p58 = por %p56, %p57
      %p60 = scmp.ne.s32.totalorder %s43, %s59
      %p61 = scmp.eq.s32.totalorder %s21, 0
      %p62 = por %p60, %p61
      %s64 = sadd.s32 %s63, 1
      %p67 = scmp.eq.s32.totalorder %s15, 3
      %p68 = scmp.ne.s32.totalorder %s63, %s65
      %p69 = scmp.eq.s32.totalorder %s15, 0
      %p70 = por %p68, %p69
      %p71 = scmp.ne.s32.totalorder %s63, %s65
      %p72 = scmp.eq.s32.totalorder %s20, 3
      %p73 = por %p71, %p72
      %p74 = scmp.ne.s32.totalorder %s65, %s66
      %p75 = scmp.eq.s32.totalorder %s20, 0
      %p76 = por %p74, %p75
      %p77 = scmp.ne.s32.totalorder %s65, %s66
      %p78 = scmp.eq.s32.totalorder %s21, 3
      %p79 = por %p77, %p78
      %p81 = scmp.ne.s32.totalorder %s66, %s80
      %p82 = scmp.eq.s32.totalorder %s21, 0
      %p83 = por %p81, %p82
      %s84 = ssub.s32 %s22, %s34
      %s85 = ssub.s32 %s23, %s30
      %s86 = sor.u32 %s84, %s85
      %p87 = scmp.eq.s32.totalorder %s86, 0
      %s89 = sadd.s32 %s88, 1
      %s90 = scalar_select %p87, %s88, %s89
      %p93 = pneg %p87
      %p94 = scmp.eq.s32.totalorder %s15, 3
      %p95 = por %p93, %p94
      %p96 = scmp.ne.s32.totalorder %s88, %s91
      %p97 = scmp.eq.s32.totalorder %s15, 0
      %p98 = por %p96, %p97
      %p99 = scmp.ne.s32.totalorder %s88, %s91
      %p100 = scmp.eq.s32.totalorder %s20, 3
      %p101 = por %p99, %p100
      %p102 = scmp.ne.s32.totalorder %s91, %s92
      %p103 = scmp.eq.s32.totalorder %s20, 0
      %p104 = por %p102, %p103
      %p105 = scmp.ne.s32.totalorder %s91, %s92
      %p106 = scmp.eq.s32.totalorder %s21, 3
      %p107 = por %p105, %p106
      %p109 = scmp.ne.s32.totalorder %s92, %s108
      %p110 = scmp.eq.s32.totalorder %s21, 0
      %p111 = por %p109, %p110
      %s112 = ssub.s32 %s22, %s34
      %s113 = ssub.s32 %s23, %s30
      %s114 = sor.u32 %s112, %s113
      %p115 = scmp.eq.s32.totalorder %s114, 0
      %s117 = sadd.s32 %s116, 1
      %s118 = scalar_select %p115, %s116, %s117
      %p121 = pneg %p115
      %p122 = scmp.eq.s32.totalorder %s15, 3
      %p123 = por %p121, %p122
      %p124 = scmp.ne.s32.totalorder %s116, %s119
      %p125 = scmp.eq.s32.totalorder %s15, 0
      %p126 = por %p124, %p125
      %p127 = scmp.ne.s32.totalorder %s116, %s119
      %p128 = scmp.eq.s32.totalorder %s20, 3
      %p129 = por %p127, %p128
      %p130 = scmp.ne.s32.totalorder %s119, %s120
      %p131 = scmp.eq.s32.totalorder %s20, 0
      %p132 = por %p130, %p131
      %p133 = scmp.ne.s32.totalorder %s119, %s120
      %p134 = scmp.eq.s32.totalorder %s21, 3
      %p135 = por %p133, %p134
      %p137 = scmp.ne.s32.totalorder %s120, %s136
      %p138 = scmp.eq.s32.totalorder %s21, 0
      %p139 = por %p137, %p138
      %s140 = ssub.s32 %s22, %s34
      %s141 = ssub.s32 %s23, %s30
      %s142 = sor.u32 %s140, %s141
      %p143 = scmp.eq.s32.totalorder %s142, 0
      %s145 = sadd.s32 %s144, 1
      %s146 = scalar_select %p143, %s144, %s145
      %p149 = pneg %p143
      %p150 = scmp.eq.s32.totalorder %s15, 3
      %p151 = por %p149, %p150
      %p152 = scmp.ne.s32.totalorder %s144, %s147
      %p153 = scmp.eq.s32.totalorder %s15, 0
      %p154 = por %p152, %p153
      %p155 = scmp.ne.s32.totalorder %s144, %s147
      %p156 = scmp.eq.s32.totalorder %s20, 3
      %p157 = por %p155, %p156
      %p158 = scmp.ne.s32.totalorder %s147, %s148
      %p159 = scmp.eq.s32.totalorder %s20, 0
      %p160 = por %p158, %p159
      %p161 = scmp.ne.s32.totalorder %s147, %s148
      %p162 = scmp.eq.s32.totalorder %s21, 3
      %p163 = por %p161, %p162
      %p165 = scmp.ne.s32.totalorder %s148, %s164
      %p166 = scmp.eq.s32.totalorder %s21, 0
      %p167 = por %p165, %p166
      %p168 = scmp.le.s32.totalorder 1, %s15
      %p169 = scmp.lt.s32.totalorder %s15, 5
      %p170 = pnand %p168, %p169
      %p171 = pneg %p170
      // Predicated region
      $region9: #{tpu_custom_call.1} parent=5 // pred_check
        _
      $region10: #{tpu_custom_call.1} parent=5 // pred_check_branch
        %173 = sbr.rel (%p170) target = $region12
      $region11: #{tpu_custom_call.1} parent=5 // pred_region
        %s174 = ssub.s32 %s15, 1
        // Predicated region
        $region13: #{tpu_custom_call.1} parent=11 // pred_check
          %p175 = pneg %p76
        $region14: #{tpu_custom_call.1} parent=11 // pred_check_branch
          %177 = sbr.rel (%p175) target = $region16
        $region15: #{tpu_custom_call.1} parent=11 // pred_region
          %s179 = ssub.s32 256, 256
          %180 = vsyncadd [#allocation5], %s179
          %s181 = sshll.u32 [#allocation4], 4
          %s182 = int_to_ptr.vmem [resolvable:$true] %s181
          %187 = dma.hbm_to_vmem [thread:$0]  %s1, 256, %s182, [#allocation5], 64, 64, 4
        $region16: #{tpu_custom_call.1} parent=11 // pred_fallthru
          _
      $region12: #{tpu_custom_call.1} parent=5 // pred_fallthru
        _
      %p188 = scmp.lt.s32.totalorder %s15, 4
      // Predicated region
      $region17: #{tpu_custom_call.1} parent=5 // pred_check
        %p189 = pneg %p188
      $region18: #{tpu_custom_call.1} parent=5 // pred_check_branch
        %191 = sbr.rel (%p189) target = $region20
      $region19: #{tpu_custom_call.1} parent=5 // pred_region
        // Predicated region
        $region21: #{tpu_custom_call.1} parent=19 // pred_check
          %p192 = pneg %p49
        $region22: #{tpu_custom_call.1} parent=19 // pred_check_branch
          %194 = sbr.rel (%p192) target = $region24
        $region23: #{tpu_custom_call.1} parent=19 // pred_region
          %s195 = sand.u32 %s39, 1
          %s196 = scalar_lea.sflag [#allocation3], %s195
          %s197 = sand.u32 %s39, 1
          %s198 = smul.addr %s197, 4
          %s199 = scalar_lea.vmem [#allocation2], %s198
          %s201 = ssub.s32 64, 64
          %202 = vsyncadd %s196, %s201
          %s203 = smul.addr %s22, 2
          %s204 = sadd.s32 %s23, %s203
          %s205 = smul.addr %s204, 64
          %s206 = scalar_lea.hbm %s0, %s205
          %s208 = sshll.u32 %s199, 4
          %s209 = int_to_ptr.vmem [resolvable:$true] %s208
          %211 = dma.hbm_to_vmem [thread:$0]  %s206, 64, %s209, %s196
        $region24: #{tpu_custom_call.1} parent=19 // pred_fallthru
          _
      $region20: #{tpu_custom_call.1} parent=5 // pred_fallthru
        _
      %p212 = scmp.le.s32.totalorder 1, %s15
      %p213 = scmp.lt.s32.totalorder %s15, 5
      %p214 = pnand %p212, %p213
      %p215 = pneg %p214
      // Predicated region
      $region25: #{tpu_custom_call.1} parent=5 // pred_check
        _
      $region26: #{tpu_custom_call.1} parent=5 // pred_check_branch
        %217 = sbr.rel (%p214) target = $region28
      $region27: #{tpu_custom_call.1} parent=5 // pred_region
        %s218 = ssub.s32 %s15, 1
        %s219 = sand.u32 %s42, 1
        %s220 = scalar_lea.sflag [#allocation3], %s219
        %s221 = sand.u32 %s42, 1
        %s222 = smul.addr %s221, 4
        %s223 = scalar_lea.vmem [#allocation2], %s222
        // Predicated region
        $region29: #{tpu_custom_call.1} parent=27 // pred_check
          %p224 = pneg %p55
        $region30: #{tpu_custom_call.1} parent=27 // pred_check_branch
          %226 = sbr.rel (%p224) target = $region32
        $region31: #{tpu_custom_call.1} parent=27 // pred_region
          %227 = dma.done %s220, 64
        $region32: #{tpu_custom_call.1} parent=27 // pred_fallthru
          _
        // Predicated region
        $region33: #{tpu_custom_call.1} parent=27 // pred_check
          %p228 = pneg %p76
        $region34: #{tpu_custom_call.1} parent=27 // pred_check_branch
          %230 = sbr.rel (%p228) target = $region36
        $region35: #{tpu_custom_call.1} parent=27 // pred_region
          %231 = dma.done [#allocation5], 256
        $region36: #{tpu_custom_call.1} parent=27 // pred_fallthru
          _
        %s232 = sand.u32 %s42, 1
        %s233 = scalar_lea.sflag [#allocation3], %s232
        %s234 = sand.u32 %s42, 1
        %s235 = smul.addr %s234, 4
        %s236 = scalar_lea.vmem [#allocation2], %s235
        %p237 = pneg %p55
        %p238 = pneg %p52
        %p239 = pneg %p76
        %p240 = pneg %p73
        %p241 = pneg %p104
        %p242 = pneg %p101
        %s243 = sand.u32 %s91, 1
        %s244 = sand.u32 %s91, 1
        %s245 = smul.addr %s244, 16
        %s246 = scalar_lea.vmem [#allocation6], %s245
        %p247 = pneg %p132
        %p248 = pneg %p129
        %s249 = sand.u32 %s119, 1
        %s250 = sand.u32 %s119, 1
        %s251 = smul.addr %s250, 16
        %s252 = scalar_lea.vmem [#allocation7], %s251
        %p253 = pneg %p160
        %p254 = pneg %p157
        %s255 = sand.u32 %s147, 1
        %s256 = sand.u32 %s147, 1
        %s257 = smul.addr %s256, 16
        %s258 = scalar_lea.vmem [#allocation8], %s257
        %v260 = vld [vmem:[%s223] sm:$0xf]
        %v261 = vld [vmem:[#allocation4] sm:$0xf]
        %v262 = vld [vmem:[#allocation4 + $0x4] sm:$0xf]
        %v263 = vld [vmem:[#allocation4 + $0x8] sm:$0xf]
        %v264 = vld [vmem:[#allocation4 + $0xc] sm:$0xf]
        %v269 = vunpack.c.l.b16 %v261
        %v270 = vunpack.c.l.b16 %v262
        %v271 = vunpack.c.l.b16 %v263
        %v272 = vunpack.c.l.b16 %v264
        %v273 = vpack.c.b16 %v270, %v269
        %v274 = vpack.c.b16 %v272, %v271
        %vm277 = vcmask 261120
        %v279 = vsel %vm277, %v260, 0
        %281 = vmatprep.subr.bf16.mxu0 0
        %282 = vmatpush1.bf16.msra.mxu0 %v273
        %283 = vmatprep.subr.bf16.mxu0 0
        %284 = vmatpush1.bf16.msra.mxu0 %v274
        %285 = vmatprep.subr.bf16.mxu0 0
        %286 = vmatpush1.bf16.msra.mxu0 0
        %287 = vmatprep.subr.bf16.mxu0 0
        %288 = vmatpush1.bf16.msra.mxu0 0
        %289 = vmatprep.subr.bf16.mxu0 0
        %290 = vmatpush1.bf16.msra.mxu0 0
        %291 = vmatprep.subr.bf16.mxu0 0
        %292 = vmatpush1.bf16.msra.mxu0 0
        %293 = vmatprep.subr.bf16.mxu0 0
        %294 = vmatpush1.bf16.msra.mxu0 0
        %295 = vmatprep.subr.bf16.mxu0 0
        %296 = vmatpush1.bf16.msra.mxu0 0
        %297 = vmatprep.subr.bf16.mxu0 0
        %298 = vmatpush1.bf16.msra.mxu0 0
        %299 = vmatprep.subr.bf16.mxu0 0
        %300 = vmatpush1.bf16.msra.mxu0 0
        %301 = vmatprep.subr.bf16.mxu0 0
        %302 = vmatpush1.bf16.msra.mxu0 0
        %303 = vmatprep.subr.bf16.mxu0 0
        %304 = vmatpush1.bf16.msra.mxu0 0
        %305 = vmatprep.subr.bf16.mxu0 0
        %306 = vmatpush1.bf16.msra.mxu0 0
        %307 = vmatprep.subr.bf16.mxu0 0
        %308 = vmatpush1.bf16.msra.mxu0 0
        %309 = vmatprep.subr.bf16.mxu0 0
        %310 = vmatpush1.bf16.msra.mxu0 0
        %311 = vmatprep.subr.bf16.mxu0 0
        %312 = vmatpush1.bf16.msra.mxu0 0
        %313 = vmatprep.mubr.bf16.mxu0 0
        %314 = vmatmul.mubr.bf16.gmra.mrb[0].mxu0 %v279
        %v315 = vpop.f32.mrb[0].mxu0
        %v316 = vadd.f32 0.0, %v315
        %v317 = vpop.f32.mrb[0].mxu0
        %v318 = vpop.f32.mrb[0].mxu0
        %v319 = vpop.f32.mrb[0].mxu0
        %320 = vdwg.mxu0
        %v321 = vpack.c.bf16 %v316, %v316
        %323 = vrot.lane.b32.xlu0 %v321, 120
        %v324 = vpop.permute.xlu0 %323
        %325 = vrot.lane.b32.xlu0 %v321, 112
        %v326 = vpop.permute.xlu0 %325
        %327 = vrot.lane.b32.xlu0 %v321, 104
        %v328 = vpop.permute.xlu0 %327
        %v330 = vunpack.c.l.s4 1983009808
        %v331 = vunpack.c.0.s8 %v330
        %v332 = vlaneseq
        %v333 = vshrl.u32 %v332, 7
        %v334 = vsub.s32 %v331, %v333
        %v335 = vrot.slane %v321, %v334
        %v338 = vunpack.c.l.s4 1983009808
        %v339 = vunpack.c.0.s8 %v338
        %v340 = vlaneseq
        %v341 = vshrl.u32 %v340, 7
        %v342 = vsub.s32 %v339, %v341
        %v343 = vrot.slane %v326, %v342
        %v344 = vcombine.low %v335, %v343
        %v345 = vcombine.high %v335, %v343
        %v347 = vunpack.c.l.s4 1934713408
        %v348 = vunpack.c.0.s8 %v347
        %v349 = vlaneseq
        %v350 = vshrl.u32 %v349, 7
        %v351 = vsub.s32 %v348, %v350
        %v352 = vrot.slane %v344, %v351
        %v354 = vunpack.c.l.s4 1934713408
        %v355 = vunpack.c.0.s8 %v354
        %v356 = vlaneseq
        %v357 = vshrl.u32 %v356, 7
        %v358 = vsub.s32 %v355, %v357
        %v359 = vrot.slane %v345, %v358
        %v360 = vcombine.high %v352, 0
        %v361 = vcombine.high %v359, 0
        %v364 = vunpack.c.l.s4 1983009808
        %v365 = vunpack.c.0.s8 %v364
        %v366 = vlaneseq
        %v367 = vshrl.u32 %v366, 7
        %v368 = vsub.s32 %v365, %v367
        %v369 = vrot.slane %v324, %v368
        %v372 = vunpack.c.l.s4 1983009808
        %v373 = vunpack.c.0.s8 %v372
        %v374 = vlaneseq
        %v375 = vshrl.u32 %v374, 7
        %v376 = vsub.s32 %v373, %v375
        %v377 = vrot.slane %v328, %v376
        %v378 = vcombine.low %v369, %v377
        %v379 = vcombine.high %v369, %v377
        %v381 = vunpack.c.l.s4 1934713408
        %v382 = vunpack.c.0.s8 %v381
        %v383 = vlaneseq
        %v384 = vshrl.u32 %v383, 7
        %v385 = vsub.s32 %v382, %v384
        %v386 = vrot.slane %v378, %v385
        %v388 = vunpack.c.l.s4 1934713408
        %v389 = vunpack.c.0.s8 %v388
        %v390 = vlaneseq
        %v391 = vshrl.u32 %v390, 7
        %v392 = vsub.s32 %v389, %v391
        %v393 = vrot.slane %v379, %v392
        %v394 = vcombine.high %v386, 0
        %v395 = vcombine.high %v393, 0
        %v398 = vpack.i.b16 %v386, %v352
        %v400 = vshrl.u32 %v352, 16
        %v401 = vshrl.u32 %v386, 16
        %v402 = vpack.i.b16 %v401, %v400
        %v406 = vpack.i.b16 %v394, %v360
        %v408 = vshrl.u32 %v360, 16
        %v409 = vshrl.u32 %v394, 16
        %v410 = vpack.i.b16 %v409, %v408
        %v414 = vpack.i.b16 %v393, %v359
        %v416 = vshrl.u32 %v359, 16
        %v417 = vshrl.u32 %v393, 16
        %v418 = vpack.i.b16 %v417, %v416
        %v422 = vpack.i.b16 %v395, %v361
        %v424 = vshrl.u32 %v361, 16
        %v425 = vshrl.u32 %v395, 16
        %v426 = vpack.i.b16 %v425, %v424
        %v428 = vcombine.low %v398, %v414
        %v430 = vunpack.c.l.s4 1983009808
        %v431 = vunpack.c.0.s8 %v430
        %v432 = vlaneseq
        %v433 = vshrl.u32 %v432, 7
        %v434 = vsub.s32 %v431, %v433
        %v435 = vrot.slane %v428, %v434
        %v436 = vcombine.low %v406, %v422
        %v438 = vunpack.c.l.s4 1983009808
        %v439 = vunpack.c.0.s8 %v438
        %v440 = vlaneseq
        %v441 = vshrl.u32 %v440, 7
        %v442 = vsub.s32 %v439, %v441
        %v443 = vrot.slane %v436, %v442
        %v444 = vcombine.low %v435, %v443
        %v446 = vunpack.c.l.s4 1934713408
        %v447 = vunpack.c.0.s8 %v446
        %v448 = vlaneseq
        %v449 = vshrl.u32 %v448, 7
        %v450 = vsub.s32 %v447, %v449
        %v451 = vrot.slane %v444, %v450
        %v452 = vcombine.high %v451, 0
        %v453 = vcombine.low %v402, %v418
        %v455 = vunpack.c.l.s4 1983009808
        %v456 = vunpack.c.0.s8 %v455
        %v457 = vlaneseq
        %v458 = vshrl.u32 %v457, 7
        %v459 = vsub.s32 %v456, %v458
        %v460 = vrot.slane %v453, %v459
        %v461 = vcombine.low %v410, %v426
        %v463 = vunpack.c.l.s4 1983009808
        %v464 = vunpack.c.0.s8 %v463
        %v465 = vlaneseq
        %v466 = vshrl.u32 %v465, 7
        %v467 = vsub.s32 %v464, %v466
        %v468 = vrot.slane %v461, %v467
        %v469 = vcombine.low %v460, %v468
        %v471 = vunpack.c.l.s4 1934713408
        %v472 = vunpack.c.0.s8 %v471
        %v473 = vlaneseq
        %v474 = vshrl.u32 %v473, 7
        %v475 = vsub.s32 %v472, %v474
        %v476 = vrot.slane %v469, %v475
        %v477 = vcombine.high %v476, 0
        %v480 = vpack.i.b16 %v476, %v451
        %v482 = vshrl.u32 %v451, 16
        %v483 = vshrl.u32 %v476, 16
        %v484 = vpack.i.b16 %v483, %v482
        %v488 = vpack.i.b16 %v477, %v452
        %v490 = vshrl.u32 %v452, 16
        %v491 = vshrl.u32 %v477, 16
        %v492 = vpack.i.b16 %v491, %v490
        %vm494 = vcmask 60416
        %495 = vst.msk [vmem:[%s246] sm:$0xf] %vm494, %v480
        %496 = vst.msk [vmem:[%s246 + $0x4] sm:$0xf] %vm494, %v484
        %497 = vst.msk [vmem:[%s246 + $0x8] sm:$0xf] %vm494, %v488
        %498 = vst.msk [vmem:[%s246 + $0xc] sm:$0xf] %vm494, %v492
        %499 = vrot.lane.b32.xlu0 %v321, 96
        %v500 = vpop.permute.xlu0 %499
        %501 = vrot.lane.b32.xlu0 %v324, 96
        %v502 = vpop.permute.xlu0 %501
        %503 = vrot.lane.b32.xlu0 %v326, 96
        %v504 = vpop.permute.xlu0 %503
        %505 = vrot.lane.b32.xlu0 %v328, 96
        %v506 = vpop.permute.xlu0 %505
        %v509 = vunpack.c.l.s4 1983009808
        %v510 = vunpack.c.0.s8 %v509
        %v511 = vlaneseq
        %v512 = vshrl.u32 %v511, 7
        %v513 = vsub.s32 %v510, %v512
        %v514 = vrot.slane %v500, %v513
        %v517 = vunpack.c.l.s4 1983009808
        %v518 = vunpack.c.0.s8 %v517
        %v519 = vlaneseq
        %v520 = vshrl.u32 %v519, 7
        %v521 = vsub.s32 %v518, %v520
        %v522 = vrot.slane %v504, %v521
        %v523 = vcombine.low %v514, %v522
        %v524 = vcombine.high %v514, %v522
        %v526 = vunpack.c.l.s4 1934713408
        %v527 = vunpack.c.0.s8 %v526
        %v528 = vlaneseq
        %v529 = vshrl.u32 %v528, 7
        %v530 = vsub.s32 %v527, %v529
        %v531 = vrot.slane %v523, %v530
        %v533 = vunpack.c.l.s4 1934713408
        %v534 = vunpack.c.0.s8 %v533
        %v535 = vlaneseq
        %v536 = vshrl.u32 %v535, 7
        %v537 = vsub.s32 %v534, %v536
        %v538 = vrot.slane %v524, %v537
        %v539 = vcombine.high %v531, 0
        %v540 = vcombine.high %v538, 0
        %v543 = vunpack.c.l.s4 1983009808
        %v544 = vunpack.c.0.s8 %v543
        %v545 = vlaneseq
        %v546 = vshrl.u32 %v545, 7
        %v547 = vsub.s32 %v544, %v546
        %v548 = vrot.slane %v502, %v547
        %v551 = vunpack.c.l.s4 1983009808
        %v552 = vunpack.c.0.s8 %v551
        %v553 = vlaneseq
        %v554 = vshrl.u32 %v553, 7
        %v555 = vsub.s32 %v552, %v554
        %v556 = vrot.slane %v506, %v555
        %v557 = vcombine.low %v548, %v556
        %v558 = vcombine.high %v548, %v556
        %v560 = vunpack.c.l.s4 1934713408
        %v561 = vunpack.c.0.s8 %v560
        %v562 = vlaneseq
        %v563 = vshrl.u32 %v562, 7
        %v564 = vsub.s32 %v561, %v563
        %v565 = vrot.slane %v557, %v564
        %v567 = vunpack.c.l.s4 1934713408
        %v568 = vunpack.c.0.s8 %v567
        %v569 = vlaneseq
        %v570 = vshrl.u32 %v569, 7
        %v571 = vsub.s32 %v568, %v570
        %v572 = vrot.slane %v558, %v571
        %v573 = vcombine.high %v565, 0
        %v574 = vcombine.high %v572, 0
        %v577 = vpack.i.b16 %v565, %v531
        %v579 = vshrl.u32 %v531, 16
        %v580 = vshrl.u32 %v565, 16
        %v581 = vpack.i.b16 %v580, %v579
        %v585 = vpack.i.b16 %v573, %v539
        %v587 = vshrl.u32 %v539, 16
        %v588 = vshrl.u32 %v573, 16
        %v589 = vpack.i.b16 %v588, %v587
        %v593 = vpack.i.b16 %v572, %v538
        %v595 = vshrl.u32 %v538, 16
        %v596 = vshrl.u32 %v572, 16
        %v597 = vpack.i.b16 %v596, %v595
        %v601 = vpack.i.b16 %v574, %v540
        %v603 = vshrl.u32 %v540, 16
        %v604 = vshrl.u32 %v574, 16
        %v605 = vpack.i.b16 %v604, %v603
        %v607 = vcombine.low %v577, %v593
        %v609 = vunpack.c.l.s4 1983009808
        %v610 = vunpack.c.0.s8 %v609
        %v611 = vlaneseq
        %v612 = vshrl.u32 %v611, 7
        %v613 = vsub.s32 %v610, %v612
        %v614 = vrot.slane %v607, %v613
        %v615 = vcombine.low %v585, %v601
        %v617 = vunpack.c.l.s4 1983009808
        %v618 = vunpack.c.0.s8 %v617
        %v619 = vlaneseq
        %v620 = vshrl.u32 %v619, 7
        %v621 = vsub.s32 %v618, %v620
        %v622 = vrot.slane %v615, %v621
        %v623 = vcombine.low %v614, %v622
        %v625 = vunpack.c.l.s4 1934713408
        %v626 = vunpack.c.0.s8 %v625
        %v627 = vlaneseq
        %v628 = vshrl.u32 %v627, 7
        %v629 = vsub.s32 %v626, %v628
        %v630 = vrot.slane %v623, %v629
        %v631 = vcombine.high %v630, 0
        %v632 = vcombine.low %v581, %v597
        %v634 = vunpack.c.l.s4 1983009808
        %v635 = vunpack.c.0.s8 %v634
        %v636 = vlaneseq
        %v637 = vshrl.u32 %v636, 7
        %v638 = vsub.s32 %v635, %v637
        %v639 = vrot.slane %v632, %v638
        %v640 = vcombine.low %v589, %v605
        %v642 = vunpack.c.l.s4 1983009808
        %v643 = vunpack.c.0.s8 %v642
        %v644 = vlaneseq
        %v645 = vshrl.u32 %v644, 7
        %v646 = vsub.s32 %v643, %v645
        %v647 = vrot.slane %v640, %v646
        %v648 = vcombine.low %v639, %v647
        %v650 = vunpack.c.l.s4 1934713408
        %v651 = vunpack.c.0.s8 %v650
        %v652 = vlaneseq
        %v653 = vshrl.u32 %v652, 7
        %v654 = vsub.s32 %v651, %v653
        %v655 = vrot.slane %v648, %v654
        %v656 = vcombine.high %v655, 0
        %v659 = vpack.i.b16 %v655, %v630
        %v661 = vshrl.u32 %v630, 16
        %v662 = vshrl.u32 %v655, 16
        %v663 = vpack.i.b16 %v662, %v661
        %v667 = vpack.i.b16 %v656, %v631
        %v669 = vshrl.u32 %v631, 16
        %v670 = vshrl.u32 %v656, 16
        %v671 = vpack.i.b16 %v670, %v669
        %673 = vst.msk [vmem:[%s252] sm:$0xf] %vm494, %v659
        %674 = vst.msk [vmem:[%s252 + $0x4] sm:$0xf] %vm494, %v663
        %675 = vst.msk [vmem:[%s252 + $0x8] sm:$0xf] %vm494, %v667
        %676 = vst.msk [vmem:[%s252 + $0xc] sm:$0xf] %vm494, %v671
        %677 = vrot.lane.b32.xlu0 %v321, 64
        %v678 = vpop.permute.xlu0 %677
        %679 = vrot.lane.b32.xlu0 %v324, 64
        %v680 = vpop.permute.xlu0 %679
        %681 = vrot.lane.b32.xlu0 %v326, 64
        %v682 = vpop.permute.xlu0 %681
        %683 = vrot.lane.b32.xlu0 %v328, 64
        %v684 = vpop.permute.xlu0 %683
        %v687 = vunpack.c.l.s4 1983009808
        %v688 = vunpack.c.0.s8 %v687
        %v689 = vlaneseq
        %v690 = vshrl.u32 %v689, 7
        %v691 = vsub.s32 %v688, %v690
        %v692 = vrot.slane %v678, %v691
        %v695 = vunpack.c.l.s4 1983009808
        %v696 = vunpack.c.0.s8 %v695
        %v697 = vlaneseq
        %v698 = vshrl.u32 %v697, 7
        %v699 = vsub.s32 %v696, %v698
        %v700 = vrot.slane %v682, %v699
        %v701 = vcombine.low %v692, %v700
        %v702 = vcombine.high %v692, %v700
        %v704 = vunpack.c.l.s4 1934713408
        %v705 = vunpack.c.0.s8 %v704
        %v706 = vlaneseq
        %v707 = vshrl.u32 %v706, 7
        %v708 = vsub.s32 %v705, %v707
        %v709 = vrot.slane %v701, %v708
        %v711 = vunpack.c.l.s4 1934713408
        %v712 = vunpack.c.0.s8 %v711
        %v713 = vlaneseq
        %v714 = vshrl.u32 %v713, 7
        %v715 = vsub.s32 %v712, %v714
        %v716 = vrot.slane %v702, %v715
        %v717 = vcombine.high %v709, 0
        %v718 = vcombine.high %v716, 0
        %v721 = vunpack.c.l.s4 1983009808
        %v722 = vunpack.c.0.s8 %v721
        %v723 = vlaneseq
        %v724 = vshrl.u32 %v723, 7
        %v725 = vsub.s32 %v722, %v724
        %v726 = vrot.slane %v680, %v725
        %v729 = vunpack.c.l.s4 1983009808
        %v730 = vunpack.c.0.s8 %v729
        %v731 = vlaneseq
        %v732 = vshrl.u32 %v731, 7
        %v733 = vsub.s32 %v730, %v732
        %v734 = vrot.slane %v684, %v733
        %v735 = vcombine.low %v726, %v734
        %v736 = vcombine.high %v726, %v734
        %v738 = vunpack.c.l.s4 1934713408
        %v739 = vunpack.c.0.s8 %v738
        %v740 = vlaneseq
        %v741 = vshrl.u32 %v740, 7
        %v742 = vsub.s32 %v739, %v741
        %v743 = vrot.slane %v735, %v742
        %v745 = vunpack.c.l.s4 1934713408
        %v746 = vunpack.c.0.s8 %v745
        %v747 = vlaneseq
        %v748 = vshrl.u32 %v747, 7
        %v749 = vsub.s32 %v746, %v748
        %v750 = vrot.slane %v736, %v749
        %v751 = vcombine.high %v743, 0
        %v752 = vcombine.high %v750, 0
        %v755 = vpack.i.b16 %v743, %v709
        %v757 = vshrl.u32 %v709, 16
        %v758 = vshrl.u32 %v743, 16
        %v759 = vpack.i.b16 %v758, %v757
        %v763 = vpack.i.b16 %v751, %v717
        %v765 = vshrl.u32 %v717, 16
        %v766 = vshrl.u32 %v751, 16
        %v767 = vpack.i.b16 %v766, %v765
        %v771 = vpack.i.b16 %v750, %v716
        %v773 = vshrl.u32 %v716, 16
        %v774 = vshrl.u32 %v750, 16
        %v775 = vpack.i.b16 %v774, %v773
        %v779 = vpack.i.b16 %v752, %v718
        %v781 = vshrl.u32 %v718, 16
        %v782 = vshrl.u32 %v752, 16
        %v783 = vpack.i.b16 %v782, %v781
        %v785 = vcombine.low %v755, %v771
        %v787 = vunpack.c.l.s4 1983009808
        %v788 = vunpack.c.0.s8 %v787
        %v789 = vlaneseq
        %v790 = vshrl.u32 %v789, 7
        %v791 = vsub.s32 %v788, %v790
        %v792 = vrot.slane %v785, %v791
        %v793 = vcombine.low %v763, %v779
        %v795 = vunpack.c.l.s4 1983009808
        %v796 = vunpack.c.0.s8 %v795
        %v797 = vlaneseq
        %v798 = vshrl.u32 %v797, 7
        %v799 = vsub.s32 %v796, %v798
        %v800 = vrot.slane %v793, %v799
        %v801 = vcombine.low %v792, %v800
        %v803 = vunpack.c.l.s4 1934713408
        %v804 = vunpack.c.0.s8 %v803
        %v805 = vlaneseq
        %v806 = vshrl.u32 %v805, 7
        %v807 = vsub.s32 %v804, %v806
        %v808 = vrot.slane %v801, %v807
        %v809 = vcombine.high %v808, 0
        %v810 = vcombine.low %v759, %v775
        %v812 = vunpack.c.l.s4 1983009808
        %v813 = vunpack.c.0.s8 %v812
        %v814 = vlaneseq
        %v815 = vshrl.u32 %v814, 7
        %v816 = vsub.s32 %v813, %v815
        %v817 = vrot.slane %v810, %v816
        %v818 = vcombine.low %v767, %v783
        %v820 = vunpack.c.l.s4 1983009808
        %v821 = vunpack.c.0.s8 %v820
        %v822 = vlaneseq
        %v823 = vshrl.u32 %v822, 7
        %v824 = vsub.s32 %v821, %v823
        %v825 = vrot.slane %v818, %v824
        %v826 = vcombine.low %v817, %v825
        %v828 = vunpack.c.l.s4 1934713408
        %v829 = vunpack.c.0.s8 %v828
        %v830 = vlaneseq
        %v831 = vshrl.u32 %v830, 7
        %v832 = vsub.s32 %v829, %v831
        %v833 = vrot.slane %v826, %v832
        %v834 = vcombine.high %v833, 0
        %v837 = vpack.i.b16 %v833, %v808
        %v839 = vshrl.u32 %v808, 16
        %v840 = vshrl.u32 %v833, 16
        %v841 = vpack.i.b16 %v840, %v839
        %v845 = vpack.i.b16 %v834, %v809
        %v847 = vshrl.u32 %v809, 16
        %v848 = vshrl.u32 %v834, 16
        %v849 = vpack.i.b16 %v848, %v847
        %851 = vst.msk [vmem:[%s258] sm:$0xf] %vm494, %v837
        %852 = vst.msk [vmem:[%s258 + $0x4] sm:$0xf] %vm494, %v841
        %853 = vst.msk [vmem:[%s258 + $0x8] sm:$0xf] %vm494, %v845
        %854 = vst.msk [vmem:[%s258 + $0xc] sm:$0xf] %vm494, %v849
        %s855 = sand.u32 %s91, 1
        %s856 = sand.u32 %s91, 1
        %s857 = smul.addr %s856, 16
        %s858 = scalar_lea.vmem [#allocation6], %s857
        %s859 = sand.u32 %s119, 1
        %s860 = sand.u32 %s119, 1
        %s861 = smul.addr %s860, 16
        %s862 = scalar_lea.vmem [#allocation7], %s861
        %s863 = sand.u32 %s147, 1
        %s864 = sand.u32 %s147, 1
        %s865 = smul.addr %s864, 16
        %s866 = scalar_lea.vmem [#allocation8], %s865
        // Predicated region
        $region37: #{tpu_custom_call.1} parent=27 // pred_check
          %p867 = pneg %p101
        $region38: #{tpu_custom_call.1} parent=27 // pred_check_branch
          %869 = sbr.rel (%p867) target = $region40
        $region39: #{tpu_custom_call.1} parent=27 // pred_region
          %s870 = smul.addr %s24, 8
          %s871 = sadd.s32 %s25, %s870
          %s872 = smul.addr %s871, 4
          %s873 = scalar_lea.vmem %s2, %s872
          // Predicated region
          $region41: #{tpu_custom_call.1} parent=39 // pred_check
            _
          $region42: #{tpu_custom_call.1} parent=39 // pred_check_branch
            %875 = sbr.rel (0) target = $region44
          $region43: #{tpu_custom_call.1} parent=39 // pred_region
            // Predicated region
            $region45: #{tpu_custom_call.1} parent=43 // pred_check
              _
            $region46: #{tpu_custom_call.1} parent=43 // pred_check_branch
              %877 = sbr.rel target = $region48
            $region47: #{tpu_custom_call.1} parent=43 // pred_region
              // Predicated region
              $region60: #{tpu_custom_call.1} parent=47 // pred_check
                _
              $region61: #{tpu_custom_call.1} parent=47 // pred_check_branch
                %898 = sbr.rel (0) target = $region63
              $region62: #{tpu_custom_call.1} parent=47 // pred_region
                loop: start=0, step=1, limit=1
                $region64: #{tpu_custom_call.1} parent=62 // loop_pre_header
                  _
                $region65: #{tpu_custom_call.1} parent=62 // loop_header
                  %s900 = sphi 0, %s904
                  %p901 = scmp.ge.s32.totalorder %s900, 1
                  %s905 = sphi %s858, %s858
                  %s906 = sphi %s873, %s873
                $region66: #{tpu_custom_call.1} parent=62 // loop_header_branch
                  %903 = sbr.rel (%p901) target = $region70
                $region67: #{tpu_custom_call.1} parent=62 // loop_body
                  _
                $region68: #{tpu_custom_call.1} parent=62 // loop_footer
                  %s904 = sadd.s32 1, %s900
                $region69: #{tpu_custom_call.1} parent=62 // loop_footer_branch
                  %899 = sbr.rel target = $region65
                $region70: #{tpu_custom_call.1} parent=62 // loop_exit
                  _
                loop: start=0, step=1, limit=1
                $region71: #{tpu_custom_call.1} parent=62 // loop_pre_header
                  _
                $region72: #{tpu_custom_call.1} parent=62 // loop_header
                  %s909 = sphi 0, %s913
                  %p910 = scmp.ge.s32.totalorder %s909, 1
                  %s914 = sphi %s858, %s858
                  %s915 = sphi %s873, %s873
                $region73: #{tpu_custom_call.1} parent=62 // loop_header_branch
                  %912 = sbr.rel (%p910) target = $region77
                $region74: #{tpu_custom_call.1} parent=62 // loop_body
                  %v916 = vld [vmem:[%s914] sm:$0xf]
                  %917 = vst [vmem:[%s915] sm:$0xf] %v916
                  %v918 = vld [vmem:[%s914 + $0x4] sm:$0xf]
                  %919 = vst [vmem:[%s915 + $0x8] sm:$0xf] %v918
                  %v920 = vld [vmem:[%s914 + $0x8] sm:$0xf]
                  %921 = vst [vmem:[%s915 + $0x10] sm:$0xf] %v920
                  %v922 = vld [vmem:[%s914 + $0xc] sm:$0xf]
                  %923 = vst [vmem:[%s915 + $0x18] sm:$0xf] %v922
                $region75: #{tpu_custom_call.1} parent=62 // loop_footer
                  %s913 = sadd.s32 1, %s909
                $region76: #{tpu_custom_call.1} parent=62 // loop_footer_branch
                  %908 = sbr.rel target = $region72
                $region77: #{tpu_custom_call.1} parent=62 // loop_exit
                  _
              $region63: #{tpu_custom_call.1} parent=47 // pred_fallthru
                _
            $region48: #{tpu_custom_call.1} parent=43 // pred_fallthru
              _
            // Predicated region
            $region49: #{tpu_custom_call.1} parent=43 // pred_check
              _
            $region50: #{tpu_custom_call.1} parent=43 // pred_check_branch
              %879 = sbr.rel (0) target = $region52
            $region51: #{tpu_custom_call.1} parent=43 // pred_region
              loop: start=0, step=1, limit=1
              $region53: #{tpu_custom_call.1} parent=51 // loop_pre_header
                _
              $region54: #{tpu_custom_call.1} parent=51 // loop_header
                %s882 = sphi 0, %s886
                %p883 = scmp.ge.s32.totalorder %s882, 1
                %s887 = sphi %s858, %s858
                %s888 = sphi %s873, %s873
              $region55: #{tpu_custom_call.1} parent=51 // loop_header_branch
                %885 = sbr.rel (%p883) target = $region59
              $region56: #{tpu_custom_call.1} parent=51 // loop_body
                %v889 = vld [vmem:[%s887] sm:$0xf]
                %890 = vst [vmem:[%s888] sm:$0xf] %v889
                %v891 = vld [vmem:[%s887 + $0x4] sm:$0xf]
                %892 = vst [vmem:[%s888 + $0x8] sm:$0xf] %v891
                %v893 = vld [vmem:[%s887 + $0x8] sm:$0xf]
                %894 = vst [vmem:[%s888 + $0x10] sm:$0xf] %v893
                %v895 = vld [vmem:[%s887 + $0xc] sm:$0xf]
                %896 = vst [vmem:[%s888 + $0x18] sm:$0xf] %v895
              $region57: #{tpu_custom_call.1} parent=51 // loop_footer
                %s886 = sadd.s32 1, %s882
              $region58: #{tpu_custom_call.1} parent=51 // loop_footer_branch
                %881 = sbr.rel target = $region54
              $region59: #{tpu_custom_call.1} parent=51 // loop_exit
                _
            $region52: #{tpu_custom_call.1} parent=43 // pred_fallthru
              _
          $region44: #{tpu_custom_call.1} parent=39 // pred_fallthru
            _
          %924 = vnop
        $region40: #{tpu_custom_call.1} parent=27 // pred_fallthru
          _
        // Predicated region
        $region78: #{tpu_custom_call.1} parent=27 // pred_check
          %p925 = pneg %p129
        $region79: #{tpu_custom_call.1} parent=27 // pred_check_branch
          %927 = sbr.rel (%p925) target = $region81
        $region80: #{tpu_custom_call.1} parent=27 // pred_region
          %s928 = smul.addr %s24, 8
          %s929 = sadd.s32 %s25, %s928
          %s930 = smul.addr %s929, 4
          %s931 = scalar_lea.vmem %s3, %s930
          // Predicated region
          $region82: #{tpu_custom_call.1} parent=80 // pred_check
            _
          $region83: #{tpu_custom_call.1} parent=80 // pred_check_branch
            %933 = sbr.rel (0) target = $region85
          $region84: #{tpu_custom_call.1} parent=80 // pred_region
            // Predicated region
            $region86: #{tpu_custom_call.1} parent=84 // pred_check
              _
            $region87: #{tpu_custom_call.1} parent=84 // pred_check_branch
              %935 = sbr.rel target = $region89
            $region88: #{tpu_custom_call.1} parent=84 // pred_region
              // Predicated region
              $region101: #{tpu_custom_call.1} parent=88 // pred_check
                _
              $region102: #{tpu_custom_call.1} parent=88 // pred_check_branch
                %956 = sbr.rel (0) target = $region104
              $region103: #{tpu_custom_call.1} parent=88 // pred_region
                loop: start=0, step=1, limit=1
                $region105: #{tpu_custom_call.1} parent=103 // loop_pre_header
                  _
                $region106: #{tpu_custom_call.1} parent=103 // loop_header
                  %s958 = sphi 0, %s962
                  %p959 = scmp.ge.s32.totalorder %s958, 1
                  %s963 = sphi %s862, %s862
                  %s964 = sphi %s931, %s931
                $region107: #{tpu_custom_call.1} parent=103 // loop_header_branch
                  %961 = sbr.rel (%p959) target = $region111
                $region108: #{tpu_custom_call.1} parent=103 // loop_body
                  _
                $region109: #{tpu_custom_call.1} parent=103 // loop_footer
                  %s962 = sadd.s32 1, %s958
                $region110: #{tpu_custom_call.1} parent=103 // loop_footer_branch
                  %957 = sbr.rel target = $region106
                $region111: #{tpu_custom_call.1} parent=103 // loop_exit
                  _
                loop: start=0, step=1, limit=1
                $region112: #{tpu_custom_call.1} parent=103 // loop_pre_header
                  _
                $region113: #{tpu_custom_call.1} parent=103 // loop_header
                  %s967 = sphi 0, %s971
                  %p968 = scmp.ge.s32.totalorder %s967, 1
                  %s972 = sphi %s862, %s862
                  %s973 = sphi %s931, %s931
                $region114: #{tpu_custom_call.1} parent=103 // loop_header_branch
                  %970 = sbr.rel (%p968) target = $region118
                $region115: #{tpu_custom_call.1} parent=103 // loop_body
                  %v974 = vld [vmem:[%s972] sm:$0xf]
                  %975 = vst [vmem:[%s973] sm:$0xf] %v974
                  %v976 = vld [vmem:[%s972 + $0x4] sm:$0xf]
                  %977 = vst [vmem:[%s973 + $0x8] sm:$0xf] %v976
                  %v978 = vld [vmem:[%s972 + $0x8] sm:$0xf]
                  %979 = vst [vmem:[%s973 + $0x10] sm:$0xf] %v978
                  %v980 = vld [vmem:[%s972 + $0xc] sm:$0xf]
                  %981 = vst [vmem:[%s973 + $0x18] sm:$0xf] %v980
                $region116: #{tpu_custom_call.1} parent=103 // loop_footer
                  %s971 = sadd.s32 1, %s967
                $region117: #{tpu_custom_call.1} parent=103 // loop_footer_branch
                  %966 = sbr.rel target = $region113
                $region118: #{tpu_custom_call.1} parent=103 // loop_exit
                  _
              $region104: #{tpu_custom_call.1} parent=88 // pred_fallthru
                _
            $region89: #{tpu_custom_call.1} parent=84 // pred_fallthru
              _
            // Predicated region
            $region90: #{tpu_custom_call.1} parent=84 // pred_check
              _
            $region91: #{tpu_custom_call.1} parent=84 // pred_check_branch
              %937 = sbr.rel (0) target = $region93
            $region92: #{tpu_custom_call.1} parent=84 // pred_region
              loop: start=0, step=1, limit=1
              $region94: #{tpu_custom_call.1} parent=92 // loop_pre_header
                _
              $region95: #{tpu_custom_call.1} parent=92 // loop_header
                %s940 = sphi 0, %s944
                %p941 = scmp.ge.s32.totalorder %s940, 1
                %s945 = sphi %s862, %s862
                %s946 = sphi %s931, %s931
              $region96: #{tpu_custom_call.1} parent=92 // loop_header_branch
                %943 = sbr.rel (%p941) target = $region100
              $region97: #{tpu_custom_call.1} parent=92 // loop_body
                %v947 = vld [vmem:[%s945] sm:$0xf]
                %948 = vst [vmem:[%s946] sm:$0xf] %v947
                %v949 = vld [vmem:[%s945 + $0x4] sm:$0xf]
                %950 = vst [vmem:[%s946 + $0x8] sm:$0xf] %v949
                %v951 = vld [vmem:[%s945 + $0x8] sm:$0xf]
                %952 = vst [vmem:[%s946 + $0x10] sm:$0xf] %v951
                %v953 = vld [vmem:[%s945 + $0xc] sm:$0xf]
                %954 = vst [vmem:[%s946 + $0x18] sm:$0xf] %v953
              $region98: #{tpu_custom_call.1} parent=92 // loop_footer
                %s944 = sadd.s32 1, %s940
              $region99: #{tpu_custom_call.1} parent=92 // loop_footer_branch
                %939 = sbr.rel target = $region95
              $region100: #{tpu_custom_call.1} parent=92 // loop_exit
                _
            $region93: #{tpu_custom_call.1} parent=84 // pred_fallthru
              _
          $region85: #{tpu_custom_call.1} parent=80 // pred_fallthru
            _
          %982 = vnop
        $region81: #{tpu_custom_call.1} parent=27 // pred_fallthru
          _
        // Predicated region
        $region119: #{tpu_custom_call.1} parent=27 // pred_check
          %p983 = pneg %p157
        $region120: #{tpu_custom_call.1} parent=27 // pred_check_branch
          %985 = sbr.rel (%p983) target = $region122
        $region121: #{tpu_custom_call.1} parent=27 // pred_region
          %s986 = smul.addr %s24, 8
          %s987 = sadd.s32 %s25, %s986
          %s988 = smul.addr %s987, 4
          %s989 = scalar_lea.vmem %s4, %s988
          // Predicated region
          $region123: #{tpu_custom_call.1} parent=121 // pred_check
            _
          $region124: #{tpu_custom_call.1} parent=121 // pred_check_branch
            %991 = sbr.rel (0) target = $region126
          $region125: #{tpu_custom_call.1} parent=121 // pred_region
            // Predicated region
            $region127: #{tpu_custom_call.1} parent=125 // pred_check
              _
            $region128: #{tpu_custom_call.1} parent=125 // pred_check_branch
              %993 = sbr.rel target = $region130
            $region129: #{tpu_custom_call.1} parent=125 // pred_region
              // Predicated region
              $region142: #{tpu_custom_call.1} parent=129 // pred_check
                _
              $region143: #{tpu_custom_call.1} parent=129 // pred_check_branch
                %1014 = sbr.rel (0) target = $region145
              $region144: #{tpu_custom_call.1} parent=129 // pred_region
                loop: start=0, step=1, limit=1
                $region146: #{tpu_custom_call.1} parent=144 // loop_pre_header
                  _
                $region147: #{tpu_custom_call.1} parent=144 // loop_header
                  %s1016 = sphi 0, %s1020
                  %p1017 = scmp.ge.s32.totalorder %s1016, 1
                  %s1021 = sphi %s866, %s866
                  %s1022 = sphi %s989, %s989
                $region148: #{tpu_custom_call.1} parent=144 // loop_header_branch
                  %1019 = sbr.rel (%p1017) target = $region152
                $region149: #{tpu_custom_call.1} parent=144 // loop_body
                  _
                $region150: #{tpu_custom_call.1} parent=144 // loop_footer
                  %s1020 = sadd.s32 1, %s1016
                $region151: #{tpu_custom_call.1} parent=144 // loop_footer_branch
                  %1015 = sbr.rel target = $region147
                $region152: #{tpu_custom_call.1} parent=144 // loop_exit
                  _
                loop: start=0, step=1, limit=1
                $region153: #{tpu_custom_call.1} parent=144 // loop_pre_header
                  _
                $region154: #{tpu_custom_call.1} parent=144 // loop_header
                  %s1025 = sphi 0, %s1029
                  %p1026 = scmp.ge.s32.totalorder %s1025, 1
                  %s1030 = sphi %s866, %s866
                  %s1031 = sphi %s989, %s989
                $region155: #{tpu_custom_call.1} parent=144 // loop_header_branch
                  %1028 = sbr.rel (%p1026) target = $region159
                $region156: #{tpu_custom_call.1} parent=144 // loop_body
                  %v1032 = vld [vmem:[%s1030] sm:$0xf]
                  %1033 = vst [vmem:[%s1031] sm:$0xf] %v1032
                  %v1034 = vld [vmem:[%s1030 + $0x4] sm:$0xf]
                  %1035 = vst [vmem:[%s1031 + $0x8] sm:$0xf] %v1034
                  %v1036 = vld [vmem:[%s1030 + $0x8] sm:$0xf]
                  %1037 = vst [vmem:[%s1031 + $0x10] sm:$0xf] %v1036
                  %v1038 = vld [vmem:[%s1030 + $0xc] sm:$0xf]
                  %1039 = vst [vmem:[%s1031 + $0x18] sm:$0xf] %v1038
                $region157: #{tpu_custom_call.1} parent=144 // loop_footer
                  %s1029 = sadd.s32 1, %s1025
                $region158: #{tpu_custom_call.1} parent=144 // loop_footer_branch
                  %1024 = sbr.rel target = $region154
                $region159: #{tpu_custom_call.1} parent=144 // loop_exit
                  _
              $region145: #{tpu_custom_call.1} parent=129 // pred_fallthru
                _
            $region130: #{tpu_custom_call.1} parent=125 // pred_fallthru
              _
            // Predicated region
            $region131: #{tpu_custom_call.1} parent=125 // pred_check
              _
            $region132: #{tpu_custom_call.1} parent=125 // pred_check_branch
              %995 = sbr.rel (0) target = $region134
            $region133: #{tpu_custom_call.1} parent=125 // pred_region
              loop: start=0, step=1, limit=1
              $region135: #{tpu_custom_call.1} parent=133 // loop_pre_header
                _
              $region136: #{tpu_custom_call.1} parent=133 // loop_header
                %s998 = sphi 0, %s1002
                %p999 = scmp.ge.s32.totalorder %s998, 1
                %s1003 = sphi %s866, %s866
                %s1004 = sphi %s989, %s989
              $region137: #{tpu_custom_call.1} parent=133 // loop_header_branch
                %1001 = sbr.rel (%p999) target = $region141
              $region138: #{tpu_custom_call.1} parent=133 // loop_body
                %v1005 = vld [vmem:[%s1003] sm:$0xf]
                %1006 = vst [vmem:[%s1004] sm:$0xf] %v1005
                %v1007 = vld [vmem:[%s1003 + $0x4] sm:$0xf]
                %1008 = vst [vmem:[%s1004 + $0x8] sm:$0xf] %v1007
                %v1009 = vld [vmem:[%s1003 + $0x8] sm:$0xf]
                %1010 = vst [vmem:[%s1004 + $0x10] sm:$0xf] %v1009
                %v1011 = vld [vmem:[%s1003 + $0xc] sm:$0xf]
                %1012 = vst [vmem:[%s1004 + $0x18] sm:$0xf] %v1011
              $region139: #{tpu_custom_call.1} parent=133 // loop_footer
                %s1002 = sadd.s32 1, %s998
              $region140: #{tpu_custom_call.1} parent=133 // loop_footer_branch
                %997 = sbr.rel target = $region136
              $region141: #{tpu_custom_call.1} parent=133 // loop_exit
                _
            $region134: #{tpu_custom_call.1} parent=125 // pred_fallthru
              _
          $region126: #{tpu_custom_call.1} parent=121 // pred_fallthru
            _
          %1040 = vnop
        $region122: #{tpu_custom_call.1} parent=27 // pred_fallthru
          _
      $region28: #{tpu_custom_call.1} parent=5 // pred_fallthru
        _
      %p1041 = scmp.le.s32.totalorder 2, %s15
      // Predicated region
      $region160: #{tpu_custom_call.1} parent=5 // pred_check
        %p1042 = pneg %p1041
      $region161: #{tpu_custom_call.1} parent=5 // pred_check_branch
        %1044 = sbr.rel (%p1042) target = $region163
      $region162: #{tpu_custom_call.1} parent=5 // pred_region
        %s1045 = ssub.s32 %s15, 2
        // Predicated region
        $region164: #{tpu_custom_call.1} parent=162 // pred_check
          %p1046 = pneg %p107
        $region165: #{tpu_custom_call.1} parent=162 // pred_check_branch
          %1048 = sbr.rel (%p1046) target = $region167
        $region166: #{tpu_custom_call.1} parent=162 // pred_region
          %s1049 = sand.u32 %s92, 1
          %s1050 = sand.u32 %s92, 1
          %s1051 = smul.addr %s1050, 16
          %s1052 = scalar_lea.vmem [#allocation6], %s1051
        $region167: #{tpu_custom_call.1} parent=162 // pred_fallthru
          _
        // Predicated region
        $region168: #{tpu_custom_call.1} parent=162 // pred_check
          %p1053 = pneg %p135
        $region169: #{tpu_custom_call.1} parent=162 // pred_check_branch
          %1055 = sbr.rel (%p1053) target = $region171
        $region170: #{tpu_custom_call.1} parent=162 // pred_region
          %s1056 = sand.u32 %s120, 1
          %s1057 = sand.u32 %s120, 1
          %s1058 = smul.addr %s1057, 16
          %s1059 = scalar_lea.vmem [#allocation7], %s1058
        $region171: #{tpu_custom_call.1} parent=162 // pred_fallthru
          _
        // Predicated region
        $region172: #{tpu_custom_call.1} parent=162 // pred_check
          %p1060 = pneg %p163
        $region173: #{tpu_custom_call.1} parent=162 // pred_check_branch
          %1062 = sbr.rel (%p1060) target = $region175
        $region174: #{tpu_custom_call.1} parent=162 // pred_region
          %s1063 = sand.u32 %s148, 1
          %s1064 = sand.u32 %s148, 1
          %s1065 = smul.addr %s1064, 16
          %s1066 = scalar_lea.vmem [#allocation8], %s1065
        $region175: #{tpu_custom_call.1} parent=162 // pred_fallthru
          _
      $region163: #{tpu_custom_call.1} parent=5 // pred_fallthru
        _
    $region6: #{tpu_custom_call.1} parent=1 // loop_footer
      %s19 = sadd.s32 1, %s15
    $region7: #{tpu_custom_call.1} parent=1 // loop_footer_branch
      %14 = sbr.rel target = $region3
    $region8: #{tpu_custom_call.1} parent=1 // loop_exit
      _
    %1067 = vsyncpa [#allocation3], 1
    %s1068 = scalar_lea.sflag [#allocation3], 1
    %1069 = vsyncpa %s1068, 1
    %1070 = vsyncpa [#allocation5], 1

</llo_original>
